<compile_context>
chip_gen: v7x
topology: tpu7x:2x2x1
jax: 0.10.0
libtpu: 0.0.40
codegen_flags: <defaults>
</compile_context>

<pallas_src>
import functools
import numbers

import jax
import jax.numpy as jnp
from jax.experimental import pallas as pl
from jax.experimental.pallas import tpu as pltpu

_LANES = 128
_MAX_TILE_ROWS = 2048   # multiple of 32; 3 streams x 2 bufs x 2048x128x4B ~ 6 MiB VMEM
_ROW_ALIGN = 32         # multiple of 8 (f32) and of 32 (int8/bool packed masks)


def _round_up(x, m):
    return ((x + m - 1) // m) * m


# ---------------- kernels: dx*dy baked in as a compile-time constant ----------------
def _masked_const_kernel(p_ref, m_ref, o_ref, *, dxdy):
    total = jnp.maximum(p_ref[...].astype(jnp.float32) * dxdy, 0.0)
    o_ref[...] = jnp.where(m_ref[...] > 0, total, 0.0).astype(o_ref.dtype)


def _nomask_const_kernel(p_ref, o_ref, *, dxdy):
    o_ref[...] = jnp.maximum(p_ref[...].astype(jnp.float32) * dxdy, 0.0).astype(o_ref.dtype)


# ---------------- kernels: dx*dy from SMEM (traced dx/dy) ----------------
def _masked_smem_kernel(dxdy_ref, p_ref, m_ref, o_ref):
    dxdy = dxdy_ref[0]
    total = jnp.maximum(p_ref[...].astype(jnp.float32) * dxdy, 0.0)
    o_ref[...] = jnp.where(m_ref[...] > 0, total, 0.0).astype(o_ref.dtype)


def _nomask_smem_kernel(dxdy_ref, p_ref, o_ref):
    dxdy = dxdy_ref[0]
    o_ref[...] = jnp.maximum(p_ref[...].astype(jnp.float32) * dxdy, 0.0).astype(o_ref.dtype)


def surface_storage(pressure, dx, dy, mask=None):
    """Pallas implementation of SurfaceStorageHead.forward."""
    pressure = jnp.asarray(pressure)            # no dtype cast: native dtype flows through
    nz, ny, nx = pressure.shape
    n = ny * nx

    # ---- choose a lane-dense layout when possible -----------------------------------
    if n % _LANES == 0:
        # (nz, ny, nx) -> (nz, n/128, 128): free contiguous reshape, full 128-lane stores.
        rows, cols = n // _LANES, _LANES
        p_in = pressure.reshape(nz, rows, cols)
        m_in = None if mask is None else jnp.asarray(mask).reshape(nz, rows, cols)
        row_cap = _MAX_TILE_ROWS
    else:
        # Fallback: tile ny, keep nx full (satisfies the (8,128) rule via full-extent
        # last dim).  Scale the row cap by ~128/nx so blocks carry the same element
        # count as the lane-dense path.
        rows, cols = ny, nx
        p_in = pressure
        m_in = None if mask is None else jnp.asarray(mask)
        row_cap = max(_ROW_ALIGN,
                      (_MAX_TILE_ROWS * _LANES // max(nx, 1)) // _ROW_ALIGN * _ROW_ALIGN)

    # ---- tile rows; aim for >=2 blocks so v7x megacore gets both TensorCores --------
    if rows > row_cap:
        tile_rows = row_cap                                   # multiple of _ROW_ALIGN
    else:
        half = _round_up(pl.cdiv(rows, 2), _ROW_ALIGN)
        tile_rows = half if half < rows else rows             # full extent if too small
    grid = (pl.cdiv(rows, tile_rows),)

    # ---- specs / cost ----------------------------------------------------------------
    in_spec = pl.BlockSpec((None, tile_rows, cols), lambda i: (nz - 1, i, 0))
    out_spec = pl.BlockSpec((tile_rows, cols), lambda i: (i, 0))
    cparams = pltpu.CompilerParams(dimension_semantics=("parallel",))
    out_shape = jax.ShapeDtypeStruct((rows, cols), jnp.float32)

    bytes_accessed = n * pressure.dtype.itemsize + n * 4      # read top plane + write out
    if m_in is not None:
        bytes_accessed += n * m_in.dtype.itemsize
    cost = pl.CostEstimate(flops=2 * n, transcendentals=0, bytes_accessed=bytes_accessed)

    # ---- fold dx*dy into the kernel when they are compile-time scalars ---------------
    if isinstance(dx, numbers.Number) and isinstance(dy, numbers.Number):
        dxdy_const = float(dx) * float(dy)
        if m_in is None:
            out2d = pl.pallas_call(
                functools.partial(_nomask_const_kernel, dxdy=dxdy_const),
                out_shape=out_shape, grid=grid,
                in_specs=[in_spec], out_specs=out_spec,
                compiler_params=cparams, cost_estimate=cost,
            )(p_in)
        else:
            out2d = pl.pallas_call(
                functools.partial(_masked_const_kernel, dxdy=dxdy_const),
                out_shape=out_shape, grid=grid,
                in_specs=[in_spec, in_spec], out_specs=out_spec,
                compiler_params=cparams, cost_estimate=cost,
            )(p_in, m_in)
    else:
        dxdy = (jnp.asarray(dx, jnp.float32) * jnp.asarray(dy, jnp.float32)).reshape(1)
        scalar_spec = pl.BlockSpec(memory_space=pltpu.SMEM)
        if m_in is None:
            out2d = pl.pallas_call(
                _nomask_smem_kernel,
                out_shape=out_shape, grid=grid,
                in_specs=[scalar_spec, in_spec], out_specs=out_spec,
                compiler_params=cparams, cost_estimate=cost,
            )(dxdy, p_in)
        else:
            out2d = pl.pallas_call(
                _masked_smem_kernel,
                out_shape=out_shape, grid=grid,
                in_specs=[scalar_spec, in_spec, in_spec], out_specs=out_spec,
                compiler_params=cparams, cost_estimate=cost,
            )(dxdy, p_in, m_in)

    return out2d.reshape(ny, nx)


def _reference(pressure, dx, dy, mask=None):
    # Pure-JAX reference mirroring the PyTorch forward exactly.
    if mask is None:
        mask = jnp.ones_like(pressure)
    mask = jnp.where(mask > 0, 1, 0)
    surface_mask = mask[-1, ...]
    total = pressure[-1, ...] * dx * dy
    total = jnp.where(total < 0, 0.0, total)
    total = jnp.where(surface_mask == 0, 0.0, total)
    return total


if __name__ == "__main__":
    key = jax.random.PRNGKey(0)
    k1, k2, k3, k4, k5 = jax.random.split(key, 5)
    dx, dy = 2.0, 3.0

    # Case 1: lane-dense path (ny*nx = 256), masked, compile-time dx*dy.
    nz, ny, nx = 4, 16, 16
    pressure = jax.random.normal(k1, (nz, ny, nx), dtype=jnp.float32)
    mask = (jax.random.uniform(k2, (nz, ny, nx)) > 0.3).astype(jnp.float32)
    out = jax.block_until_ready(surface_storage(pressure, dx, dy, mask))
    assert out.shape == (ny, nx)
    assert jnp.allclose(out, _reference(pressure, dx, dy, mask), atol=1e-6), "masked mismatch"

    # Case 1b: mask=None path (2-input kernel, no ones array materialized).
    out_nm = jax.block_until_ready(surface_storage(pressure, dx, dy, None))
    assert jnp.allclose(out_nm, _reference(pressure, dx, dy, None), atol=1e-6), "no-mask mismatch"

    # Case 2: fallback path (ny*nx = 240, not a multiple of 128).
    nz2, ny2, nx2 = 3, 12, 20
    pressure2 = jax.random.normal(k3, (nz2, ny2, nx2), dtype=jnp.float32)
    mask2 = (jax.random.uniform(k4, (nz2, ny2, nx2)) > 0.3).astype(jnp.float32)
    out2 = jax.block_until_ready(surface_storage(pressure2, dx, dy, mask2))
    assert out2.shape == (ny2, nx2)
    assert jnp.allclose(out2, _reference(pressure2, dx, dy, mask2), atol=1e-6), "fallback mismatch"

    # Case 3: multi-block grid (>=2 blocks, exercises megacore split) + traced dx/dy (SMEM path).
    nz3, ny3, nx3 = 2, 128, 64
    pressure3 = jax.random.normal(k5, (nz3, ny3, nx3), dtype=jnp.float32)
    dxj, dyj = jnp.asarray(dx, jnp.float32), jnp.asarray(dy, jnp.float32)
    out3 = jax.block_until_ready(surface_storage(pressure3, dxj, dyj, None))
    assert out3.shape == (ny3, nx3)
    assert jnp.allclose(out3, _reference(pressure3, dx, dy, None), atol=1e-6), "smem-path mismatch"

    print("KERNEL_OK")
</pallas_src>

<mosaic_0001>
module attributes {stable_mosaic.version = 11 : i64} {
  func.func @_masked_const_kernel(%arg0: i32, %arg1: memref<1x2x128xf32, #tpu.memory_space<vmem>>, %arg2: memref<1x2x128xf32, #tpu.memory_space<vmem>>, %arg3: memref<2x128xf32, #tpu.memory_space<vmem>>) attributes {dimension_semantics = [#tpu.dimension_semantics<parallel>], iteration_bounds = array<i64: 1>, scalar_prefetch = 0 : i64, scratch_operands = 0 : i64, tpu.core_type = #tpu.core_type<tc>, window_params = [{transform_indices = @transform_0, window_bounds = array<i64: 1, 2, 128>}, {transform_indices = @transform_1, window_bounds = array<i64: 1, 2, 128>}, {transform_indices = @transform_2, window_bounds = array<i64: 2, 128>}]} {
    %c0 = arith.constant 0 : index
    %c0_0 = arith.constant 0 : index
    %c0_1 = arith.constant 0 : index
    %0 = vector.load %arg1[%c0, %c0_0, %c0_1] : memref<1x2x128xf32, #tpu.memory_space<vmem>>, vector<1x2x128xf32>
    %1 = vector.shape_cast %0 : vector<1x2x128xf32> to vector<2x128xf32>
    %cst = arith.constant 6.000000e+00 : f32
    %2 = vector.broadcast %cst : f32 to vector<2x128xf32>
    %3 = arith.mulf %1, %2 : vector<2x128xf32>
    %cst_2 = arith.constant 0.000000e+00 : f32
    %4 = vector.broadcast %cst_2 : f32 to vector<2x128xf32>
    %5 = arith.maximumf %3, %4 : vector<2x128xf32>
    %c0_3 = arith.constant 0 : index
    %c0_4 = arith.constant 0 : index
    %c0_5 = arith.constant 0 : index
    %6 = vector.load %arg2[%c0_3, %c0_4, %c0_5] : memref<1x2x128xf32, #tpu.memory_space<vmem>>, vector<1x2x128xf32>
    %7 = vector.shape_cast %6 : vector<1x2x128xf32> to vector<2x128xf32>
    %cst_6 = arith.constant 0.000000e+00 : f32
    %8 = vector.broadcast %cst_6 : f32 to vector<2x128xf32>
    %9 = arith.cmpf ogt, %7, %8 : vector<2x128xf32>
    %cst_7 = arith.constant 0.000000e+00 : f32
    %10 = vector.broadcast %cst_7 : f32 to vector<2x128xf32>
    %11 = arith.select %9, %5, %10 : vector<2x128xi1>, vector<2x128xf32>
    %c0_8 = arith.constant 0 : index
    %c0_9 = arith.constant 0 : index
    %12 = vector.load %arg3[%c0_8, %c0_9] : memref<2x128xf32, #tpu.memory_space<vmem>>, vector<2x128xf32>
    tpu.vector_store %arg3[%c0_8, %c0_9], %11 {strides = array<i32>} : memref<2x128xf32, #tpu.memory_space<vmem>>, vector<2x128xf32>,
    return
  }
  func.func @transform_0(%arg0: i32) -> (i32, i32, i32) {
    %c3_i32 = arith.constant 3 : i32
    %c0_i32 = arith.constant 0 : i32
    %c0_i32_0 = arith.constant 0 : i32
    return %c3_i32, %arg0, %c0_i32 : i32, i32, i32
  }
  func.func @transform_1(%arg0: i32) -> (i32, i32, i32) {
    %c3_i32 = arith.constant 3 : i32
    %c0_i32 = arith.constant 0 : i32
    %c0_i32_0 = arith.constant 0 : i32
    return %c3_i32, %arg0, %c0_i32 : i32, i32, i32
  }
  func.func @transform_2(%arg0: i32) -> (i32, i32) {
    %c0_i32 = arith.constant 0 : i32
    %c0_i32_0 = arith.constant 0 : i32
    return %arg0, %c0_i32 : i32, i32
  }
}

</mosaic_0001>

<llo_original>
// kernel: tpu_custom_call.1
$region0: #{tpu_custom_call.1}
  #allocation0 [shape = 'u32[]', space=smem, size = 0x4, offset = 0x4, fixed_abs, tag = 'smem constant byte address 0x4 - core index']
  #allocation1 [shape = 'u32[144,128]{1,0:T(1,128)}', space=vmem, size = 0x12000, scoped, tag = 'internal scratch']
  %s0 = inlined_call_operand.hbm [shape: f32[4,2,128], index: 0, kind: input, shape index: {}]
  %s1 = inlined_call_operand.hbm [shape: f32[4,2,128], index: 1, kind: input, shape index: {}]
  %s2 = inlined_call_operand.hbm [shape: f32[2,128], index: 2, kind: output, shape index: {}]
  %s3 = sld [smem:[#allocation0]]
  $region26: #{tpu_custom_call.1} parent=0
    _
  %s5 = ssub.s32 1, %s3
  %s6 = scalar_select 0, %s5, %s3
  $region1: #{tpu_custom_call.1} parent=0
    #allocation2 [shape = 'u8[1024]{0}', space=vmem, size = 0x400, scoped, tag = 'input window, operand 0, single buffered']
    #allocation3 [shape = 's32[1]{0}', space=sflag, size = 0x4, scoped, tag = 'scoped memory for tpu_custom_call.1']
    #allocation4 [shape = 's32[1]{0}', space=sflag, size = 0x4, scoped, tag = 'scoped memory for tpu_custom_call.1']
    #allocation5 [shape = 'u8[1024]{0}', space=vmem, size = 0x400, scoped, tag = 'input window, operand 1, single buffered']
    #allocation6 [shape = 's32[1]{0}', space=sflag, size = 0x4, scoped, tag = 'scoped memory for tpu_custom_call.1']
    #allocation7 [shape = 'u8[1024]{0}', space=vmem, size = 0x400, scoped, tag = 'output window, operand 0, single buffered']
    %7 = vsyncpa [#allocation3], 0
    %8 = vsyncpa [#allocation6], 0
    %9 = vsyncpa [#allocation4], 0
    // Predicated region
    $region2: #{tpu_custom_call.1} parent=1 // pred_check
      _
    $region3: #{tpu_custom_call.1} parent=1 // pred_check_branch
      %11 = sbr.rel (0) target = $region5
    $region4: #{tpu_custom_call.1} parent=1 // pred_region
      %s13 = ssub.s32 32, 32
      %14 = vsyncadd [#allocation3], %s13
      %s15 = scalar_lea.hbm %s0, 96
      %s17 = sshll.u32 [#allocation2], 4
      %s18 = int_to_ptr.vmem [resolvable:$true] %s17
      %20 = dma.hbm_to_vmem [thread:$0]  %s15, 32, %s18, [#allocation3]
    $region5: #{tpu_custom_call.1} parent=1 // pred_fallthru
      _
    // Predicated region
    $region6: #{tpu_custom_call.1} parent=1 // pred_check
      _
    $region7: #{tpu_custom_call.1} parent=1 // pred_check_branch
      %22 = sbr.rel (0) target = $region9
    $region8: #{tpu_custom_call.1} parent=1 // pred_region
      %s24 = ssub.s32 32, 32
      %25 = vsyncadd [#allocation6], %s24
      %s26 = scalar_lea.hbm %s1, 96
      %s28 = sshll.u32 [#allocation5], 4
      %s29 = int_to_ptr.vmem [resolvable:$true] %s28
      %31 = dma.hbm_to_vmem [thread:$0]  %s26, 32, %s29, [#allocation6]
    $region9: #{tpu_custom_call.1} parent=1 // pred_fallthru
      _
    // Predicated region
    $region10: #{tpu_custom_call.1} parent=1 // pred_check
      _
    $region11: #{tpu_custom_call.1} parent=1 // pred_check_branch
      %33 = sbr.rel (0) target = $region13
    $region12: #{tpu_custom_call.1} parent=1 // pred_region
      %34 = dma.done [#allocation3], 32
    $region13: #{tpu_custom_call.1} parent=1 // pred_fallthru
      _
    // Predicated region
    $region14: #{tpu_custom_call.1} parent=1 // pred_check
      _
    $region15: #{tpu_custom_call.1} parent=1 // pred_check_branch
      %36 = sbr.rel (0) target = $region17
    $region16: #{tpu_custom_call.1} parent=1 // pred_region
      %37 = dma.done [#allocation6], 32
    $region17: #{tpu_custom_call.1} parent=1 // pred_fallthru
      _
    %v38 = vld [vmem:[#allocation2] sm:$0x3]
    %v39 = vmul.f32 %v38, 6.0
    %v40 = vmax.f32 %v39, 0.0
    %v41 = vld [vmem:[#allocation5] sm:$0x3]
    %vm42 = vcmp.gt.f32.partialorder %v41, 0.0
    %v43 = vsel %vm42, %v40, 0.0
    %44 = vst [vmem:[#allocation7] sm:$0x3] %v43
    // Predicated region
    $region18: #{tpu_custom_call.1} parent=1 // pred_check
      _
    $region19: #{tpu_custom_call.1} parent=1 // pred_check_branch
      %46 = sbr.rel (0) target = $region21
    $region20: #{tpu_custom_call.1} parent=1 // pred_region
      %s48 = ssub.s32 32, 32
      %49 = vsyncadd [#allocation4], %s48
      %s51 = sshll.u32 [#allocation7], 4
      %s52 = int_to_ptr.vmem [resolvable:$true] %s51
      %54 = dma.vmem_to_hbm [thread:$0]  %s52, 32, %s2, [#allocation4]
    $region21: #{tpu_custom_call.1} parent=1 // pred_fallthru
      _
    // Predicated region
    $region22: #{tpu_custom_call.1} parent=1 // pred_check
      _
    $region23: #{tpu_custom_call.1} parent=1 // pred_check_branch
      %56 = sbr.rel (0) target = $region25
    $region24: #{tpu_custom_call.1} parent=1 // pred_region
      %57 = dma.done [#allocation4], 32
    $region25: #{tpu_custom_call.1} parent=1 // pred_fallthru
      _
    %58 = vsyncpa [#allocation3], 1
    %59 = vsyncpa [#allocation6], 1
    %60 = vsyncpa [#allocation4], 1

</llo_original>
